<compile_context>
chip_gen: v6e
topology: v6e:2x2x1
jax: 0.10.0
libtpu: 0.0.40
codegen_flags: <defaults>
</compile_context>

<pallas_src>
import jax
import jax.numpy as jnp
from jax.experimental import pallas as pl
from jax.experimental.pallas import tpu as pltpu

IN_FEATURES = 128
OUT_FEATURES = 10

# Default batch tile (rows of x per grid step).  8192 rows -> 4 MiB x buffer
# + 4 MiB lane-padded out buffer, double-buffered = ~16 MiB VMEM.
MAX_TILE_B = 8192

_LANE = 128
_SUBLANE = 8


def _linear_kernel(x_ref, w_ref, b_ref, o_ref):
    # x_ref: (TB, 128)  w_ref: (128, 10)  b_ref: (1, 10)  o_ref: (TB, 10)
    acc = jnp.dot(x_ref[...], w_ref[...], preferred_element_type=jnp.float32)
    o_ref[...] = (acc + b_ref[...]).astype(o_ref.dtype)


def _round_up(v, m):
    return ((v + m - 1) // m) * m


def _choose_tile(batch, tile_b):
    """Pick a batch tile: multiple of 8, and >= 2 grid steps when possible."""
    # Robustness (feedback): clamp requested tile to a multiple of 8 so the
    # sublane dim of the x/out blocks never violates the (8, 128) constraint.
    tile_b = max(_SUBLANE, (tile_b // _SUBLANE) * _SUBLANE)
    if batch <= tile_b:
        if batch >= 2 * _SUBLANE:
            # Split into at least 2 grid steps so v7x's two TensorCores both
            # get work; neutral on single-TC v5e/v6e.
            return min(tile_b, _round_up(pl.cdiv(batch, 2), _SUBLANE))
        # Tiny batch: single full-extent block (valid even if B % 8 != 0).
        return batch
    return tile_b


def classifier_forward(x, w, b, *, tile_b=MAX_TILE_B):
    """x: (B, 128) f32, w: (128, 10) f32, b: (10,) f32 -> (B, 10) f32."""
    B = x.shape[0]
    b2d = b.reshape(1, OUT_FEATURES)

    tb = _choose_tile(B, tile_b)
    grid = (pl.cdiv(B, tb),)

    # VMEM budget: x tile + lane-padded (tb, 128) output tile, double-buffered,
    # plus headroom for W/b and compiler scratch.  Floor 32 MiB (covers v5e's
    # 16 MiB scoped default once tb > 4096), cap 48 MiB (< v7x 64 MiB physical).
    per_step_bytes = tb * IN_FEATURES * 4 + tb * _LANE * 4
    vmem_limit = min(48 << 20, max(32 << 20, 2 * per_step_bytes + (4 << 20)))

    cost = pl.CostEstimate(
        flops=2 * B * IN_FEATURES * OUT_FEATURES,
        transcendentals=0,
        bytes_accessed=(
            B * IN_FEATURES               # x read
            + B * OUT_FEATURES            # out write (unpadded)
            + IN_FEATURES * OUT_FEATURES  # w read
            + OUT_FEATURES                # b read
        ) * 4,
    )

    return pl.pallas_call(
        _linear_kernel,
        out_shape=jax.ShapeDtypeStruct((B, OUT_FEATURES), x.dtype),
        grid=grid,
        in_specs=[
            # x streams tile-by-tile over the batch (double-buffered).
            pl.BlockSpec((tb, IN_FEATURES), lambda i: (i, 0)),
            # W and b map to the same block every step -> VMEM-resident.
            pl.BlockSpec((IN_FEATURES, OUT_FEATURES), lambda i: (0, 0)),
            pl.BlockSpec((1, OUT_FEATURES), lambda i: (0, 0)),
        ],
        out_specs=pl.BlockSpec((tb, OUT_FEATURES), lambda i: (i, 0)),
        compiler_params=pltpu.CompilerParams(
            # Batch tiles are independent: lets v7x shard the grid over its
            # two TensorCores; neutral on single-TC v5e/v6e.
            dimension_semantics=("parallel",),
            vmem_limit_bytes=int(vmem_limit),
        ),
        cost_estimate=cost,
    )(x, w, b2d)


def init_params(key):
    # Match PyTorch nn.Linear default init: U(-1/sqrt(fan_in), 1/sqrt(fan_in)).
    kw, kb = jax.random.split(key)
    bound = 1.0 / jnp.sqrt(jnp.float32(IN_FEATURES))
    # Stored transposed relative to PyTorch's (out, in) weight -> (in, out).
    w = jax.random.uniform(
        kw, (IN_FEATURES, OUT_FEATURES), jnp.float32, -bound, bound
    )
    b = jax.random.uniform(kb, (OUT_FEATURES,), jnp.float32, -bound, bound)
    return w, b


if __name__ == "__main__":
    key = jax.random.PRNGKey(0)
    kx, kp = jax.random.split(key)
    w, b = init_params(kp)

    # Tiny batch (B=8): single full-extent block path.
    batch = 8
    x = jax.random.normal(kx, (batch, IN_FEATURES), jnp.float32)
    out = jax.block_until_ready(classifier_forward(x, w, b))
    ref = x @ w + b
    assert out.shape == (batch, OUT_FEATURES)
    assert jnp.allclose(out, ref, atol=1e-5, rtol=1e-5)

    # B=16: auto-split into 2 grid steps (megacore / streaming path).
    x2 = jax.random.normal(jax.random.PRNGKey(1), (16, IN_FEATURES),
                           jnp.float32)
    out2 = jax.block_until_ready(classifier_forward(x2, w, b))
    assert out2.shape == (16, OUT_FEATURES)
    assert jnp.allclose(out2, x2 @ w + b, atol=1e-5, rtol=1e-5)

    # B=20 with a non-multiple-of-8 tile request: exercises tile clamping
    # (12 -> 8) and a partial, masked last block (3 grid steps).
    x3 = jax.random.normal(jax.random.PRNGKey(2), (20, IN_FEATURES),
                           jnp.float32)
    out3 = jax.block_until_ready(classifier_forward(x3, w, b, tile_b=12))
    assert out3.shape == (20, OUT_FEATURES)
    assert jnp.allclose(out3, x3 @ w + b, atol=1e-5, rtol=1e-5)

    print("KERNEL_OK")
</pallas_src>

<mosaic_0001>
module attributes {stable_mosaic.version = 11 : i64} {
  func.func @_linear_kernel(%arg0: i32, %arg1: memref<8x128xf32, #tpu.memory_space<vmem>>, %arg2: memref<128x10xf32, #tpu.memory_space<vmem>>, %arg3: memref<1x10xf32, #tpu.memory_space<vmem>>, %arg4: memref<8x10xf32, #tpu.memory_space<vmem>>) attributes {dimension_semantics = [#tpu.dimension_semantics<parallel>], iteration_bounds = array<i64: 1>, scalar_prefetch = 0 : i64, scratch_operands = 0 : i64, tpu.core_type = #tpu.core_type<tc>, window_params = [{transform_indices = @transform_0, window_bounds = array<i64: 8, 128>}, {pipeline_mode = #tpu.pipeline_mode<synchronous>, transform_indices = @transform_1, window_bounds = array<i64: 128, 10>}, {pipeline_mode = #tpu.pipeline_mode<synchronous>, transform_indices = @transform_2, window_bounds = array<i64: 1, 10>}, {transform_indices = @transform_3, window_bounds = array<i64: 8, 10>}]} {
    %c0 = arith.constant 0 : index
    %c0_0 = arith.constant 0 : index
    %0 = vector.load %arg1[%c0, %c0_0] : memref<8x128xf32, #tpu.memory_space<vmem>>, vector<8x128xf32>
    %c0_1 = arith.constant 0 : index
    %c0_2 = arith.constant 0 : index
    %1 = vector.load %arg2[%c0_1, %c0_2] : memref<128x10xf32, #tpu.memory_space<vmem>>, vector<128x10xf32>
    %cst = arith.constant dense<0.000000e+00> : vector<8x10xf32>
    %2 = tpu.matmul %0, %1, %cst {dimension_numbers = #tpu.dot_dimension_numbers<[1], [0], [0], [1], [0, 0, 1, 1], [], []>} : vector<8x128xf32>, vector<128x10xf32>, vector<8x10xf32> -> vector<8x10xf32>
    %c0_3 = arith.constant 0 : index
    %c0_4 = arith.constant 0 : index
    %3 = vector.load %arg3[%c0_3, %c0_4] : memref<1x10xf32, #tpu.memory_space<vmem>>, vector<1x10xf32>
    %4 = vector.broadcast %3 : vector<1x10xf32> to vector<8x10xf32>
    %5 = arith.addf %2, %4 : vector<8x10xf32>
    %c0_5 = arith.constant 0 : index
    %c0_6 = arith.constant 0 : index
    %6 = vector.load %arg4[%c0_5, %c0_6] : memref<8x10xf32, #tpu.memory_space<vmem>>, vector<8x10xf32>
    tpu.vector_store %arg4[%c0_5, %c0_6], %5 {strides = array<i32>} : memref<8x10xf32, #tpu.memory_space<vmem>>, vector<8x10xf32>,
    return
  }
  func.func @transform_0(%arg0: i32) -> (i32, i32) {
    %c0_i32 = arith.constant 0 : i32
    %c0_i32_0 = arith.constant 0 : i32
    return %arg0, %c0_i32 : i32, i32
  }
  func.func @transform_1(%arg0: i32) -> (i32, i32) {
    %c0_i32 = arith.constant 0 : i32
    %c0_i32_0 = arith.constant 0 : i32
    %c0_i32_1 = arith.constant 0 : i32
    return %c0_i32, %c0_i32_0 : i32, i32
  }
  func.func @transform_2(%arg0: i32) -> (i32, i32) {
    %c0_i32 = arith.constant 0 : i32
    %c0_i32_0 = arith.constant 0 : i32
    %c0_i32_1 = arith.constant 0 : i32
    return %c0_i32, %c0_i32_0 : i32, i32
  }
  func.func @transform_3(%arg0: i32) -> (i32, i32) {
    %c0_i32 = arith.constant 0 : i32
    %c0_i32_0 = arith.constant 0 : i32
    return %arg0, %c0_i32 : i32, i32
  }
}

</mosaic_0001>

<llo_original>
// kernel: tpu_custom_call.1
$region0: #{tpu_custom_call.1}
  #allocation0 [shape = 'u32[]', space=smem, size = 0x4, offset = 0x4, fixed_abs, tag = 'smem constant byte address 0x4 - core index']
  #allocation1 [shape = 'u32[144,128]{1,0:T(1,128)}', space=vmem, size = 0x12000, scoped, tag = 'internal scratch']
  %s0 = inlined_call_operand.vmem [shape: f32[8,128], index: 0, kind: input, shape index: {}]
  %s1 = inlined_call_operand.vmem [shape: f32[128,10], index: 1, kind: input, shape index: {}]
  %s2 = inlined_call_operand.vmem [shape: f32[1,10], index: 2, kind: input, shape index: {}]
  %s3 = inlined_call_operand.hbm [shape: f32[8,10], index: 3, kind: output, shape index: {}]
  %s4 = sld [smem:[#allocation0]]
  $region22: #{tpu_custom_call.1} parent=0
    _
  %s6 = ssub.s32 1, %s4
  %s7 = scalar_select 0, %s6, %s4
  $region1: #{tpu_custom_call.1} parent=0
    #allocation2 [shape = 'u8[4096]{0}', space=vmem, size = 0x1000, scoped, tag = 'output window, operand 0, single buffered']
    #allocation3 [shape = 's32[1]{0}', space=sflag, size = 0x4, scoped, tag = 'scoped memory for tpu_custom_call.1']
    %8 = vsyncpa [#allocation3], 0
    // Predicated region
    $region2: #{tpu_custom_call.1} parent=1 // pred_check
      _
    $region3: #{tpu_custom_call.1} parent=1 // pred_check_branch
      %10 = sbr.rel (0) target = $region5
    $region4: #{tpu_custom_call.1} parent=1 // pred_region
      _
    $region5: #{tpu_custom_call.1} parent=1 // pred_fallthru
      _
    // Predicated region
    $region6: #{tpu_custom_call.1} parent=1 // pred_check
      _
    $region7: #{tpu_custom_call.1} parent=1 // pred_check_branch
      %12 = sbr.rel (0) target = $region9
    $region8: #{tpu_custom_call.1} parent=1 // pred_region
      _
    $region9: #{tpu_custom_call.1} parent=1 // pred_fallthru
      _
    // Predicated region
    $region10: #{tpu_custom_call.1} parent=1 // pred_check
      _
    $region11: #{tpu_custom_call.1} parent=1 // pred_check_branch
      %14 = sbr.rel (0) target = $region13
    $region12: #{tpu_custom_call.1} parent=1 // pred_region
      _
    $region13: #{tpu_custom_call.1} parent=1 // pred_fallthru
      _
    %v15 = vld [vmem:[%s0] sm:$0xff]
    %v16 = vld [vmem:[%s1] sm:$0xff]
    %v17 = vld [vmem:[%s1 + $0x8] sm:$0xff]
    %v18 = vld [vmem:[%s1 + $0x10] sm:$0xff]
    %v19 = vld [vmem:[%s1 + $0x18] sm:$0xff]
    %v20 = vld [vmem:[%s1 + $0x20] sm:$0xff]
    %v21 = vld [vmem:[%s1 + $0x28] sm:$0xff]
    %v22 = vld [vmem:[%s1 + $0x30] sm:$0xff]
    %v23 = vld [vmem:[%s1 + $0x38] sm:$0xff]
    %v24 = vld [vmem:[%s1 + $0x40] sm:$0xff]
    %v25 = vld [vmem:[%s1 + $0x48] sm:$0xff]
    %v26 = vld [vmem:[%s1 + $0x50] sm:$0xff]
    %v27 = vld [vmem:[%s1 + $0x58] sm:$0xff]
    %v28 = vld [vmem:[%s1 + $0x60] sm:$0xff]
    %v29 = vld [vmem:[%s1 + $0x68] sm:$0xff]
    %v30 = vld [vmem:[%s1 + $0x70] sm:$0xff]
    %v31 = vld [vmem:[%s1 + $0x78] sm:$0xff]
    %v32 = vld [vmem:[%s2] sm:$0x1]
    %v34 = vlaneseq
    %v35 = vshrl.u32 %v34, 7
    %v36 = vsub.s32 0, %v35
    %v37 = vrot.slane %v32, %v36
    %39 = vmatprep.subr.mxu0 0.0
    %40 = vmatpush1.msra.mxu0 %v31
    %41 = vmatprep.subr.mxu0 0.0
    %42 = vmatpush1.msra.mxu0 %v30
    %43 = vmatprep.subr.mxu0 0.0
    %44 = vmatpush1.msra.mxu0 %v29
    %45 = vmatprep.subr.mxu0 0.0
    %46 = vmatpush1.msra.mxu0 %v28
    %47 = vmatprep.subr.mxu0 0.0
    %48 = vmatpush1.msra.mxu0 %v27
    %49 = vmatprep.subr.mxu0 0.0
    %50 = vmatpush1.msra.mxu0 %v26
    %51 = vmatprep.subr.mxu0 0.0
    %52 = vmatpush1.msra.mxu0 %v25
    %53 = vmatprep.subr.mxu0 0.0
    %54 = vmatpush1.msra.mxu0 %v24
    %55 = vmatprep.subr.mxu0 0.0
    %56 = vmatpush1.msra.mxu0 %v23
    %57 = vmatprep.subr.mxu0 0.0
    %58 = vmatpush1.msra.mxu0 %v22
    %59 = vmatprep.subr.mxu0 0.0
    %60 = vmatpush1.msra.mxu0 %v21
    %61 = vmatprep.subr.mxu0 0.0
    %62 = vmatpush1.msra.mxu0 %v20
    %63 = vmatprep.subr.mxu0 0.0
    %64 = vmatpush1.msra.mxu0 %v19
    %65 = vmatprep.subr.mxu0 0.0
    %66 = vmatpush1.msra.mxu0 %v18
    %67 = vmatprep.subr.mxu0 0.0
    %68 = vmatpush1.msra.mxu0 %v17
    %69 = vmatprep.subr.mxu0 0.0
    %70 = vmatpush1.msra.mxu0 %v16
    %71 = vmatprep.subr.mxu0 0.0
    %72 = vmatpush2.msra.mxu0 0.0
    %73 = vmatprep.subr.mxu0 0.0
    %74 = vmatpush2.msra.mxu0 0.0
    %75 = vmatprep.subr.mxu0 0.0
    %76 = vmatpush2.msra.mxu0 0.0
    %77 = vmatprep.subr.mxu0 0.0
    %78 = vmatpush2.msra.mxu0 0.0
    %79 = vmatprep.subr.mxu0 0.0
    %80 = vmatpush2.msra.mxu0 0.0
    %81 = vmatprep.subr.mxu0 0.0
    %82 = vmatpush2.msra.mxu0 0.0
    %83 = vmatprep.subr.mxu0 0.0
    %84 = vmatpush2.msra.mxu0 0.0
    %85 = vmatprep.subr.mxu0 0.0
    %86 = vmatpush2.msra.mxu0 0.0
    %87 = vmatprep.subr.mxu0 0.0
    %88 = vmatpush2.msra.mxu0 0.0
    %89 = vmatprep.subr.mxu0 0.0
    %90 = vmatpush2.msra.mxu0 0.0
    %91 = vmatprep.subr.mxu0 0.0
    %92 = vmatpush2.msra.mxu0 0.0
    %93 = vmatprep.subr.mxu0 0.0
    %94 = vmatpush2.msra.mxu0 0.0
    %95 = vmatprep.subr.mxu0 0.0
    %96 = vmatpush2.msra.mxu0 0.0
    %97 = vmatprep.subr.mxu0 0.0
    %98 = vmatpush2.msra.mxu0 0.0
    %99 = vmatprep.subr.mxu0 0.0
    %100 = vmatpush2.msra.mxu0 0.0
    %101 = vmatprep.subr.mxu0 0.0
    %102 = vmatpush2.msra.mxu0 0.0
    %103 = vmatprep.mubr.f32.mxu0 0.0
    %104 = vmatmul.mubr.f32.gmra.mxu0 %v15
    %v105 = vpop.f32.mrf.mxu0
    %v106 = vadd.f32 %v37, %v105
    %v107 = vpop.f32.mrf.mxu0
    %108 = vdwg.mxu0
    %vm109 = vcmask 80896
    %110 = vst.msk [vmem:[#allocation2] sm:$0xff] %vm109, %v106
    // Predicated region
    $region14: #{tpu_custom_call.1} parent=1 // pred_check
      _
    $region15: #{tpu_custom_call.1} parent=1 // pred_check_branch
      %112 = sbr.rel (0) target = $region17
    $region16: #{tpu_custom_call.1} parent=1 // pred_region
      %s114 = ssub.s32 128, 128
      %115 = vsyncadd [#allocation3], %s114
      %s117 = sshll.u32 [#allocation2], 4
      %s118 = int_to_ptr.vmem [resolvable:$true] %s117
      %120 = dma.vmem_to_hbm [thread:$0]  %s118, 128, %s3, [#allocation3]
    $region17: #{tpu_custom_call.1} parent=1 // pred_fallthru
      _
    // Predicated region
    $region18: #{tpu_custom_call.1} parent=1 // pred_check
      _
    $region19: #{tpu_custom_call.1} parent=1 // pred_check_branch
      %122 = sbr.rel (0) target = $region21
    $region20: #{tpu_custom_call.1} parent=1 // pred_region
      %123 = dma.done [#allocation3], 128
    $region21: #{tpu_custom_call.1} parent=1 // pred_fallthru
      _
    %124 = vsyncpa [#allocation3], 1

</llo_original>
